<compile_context>
chip_gen: v7x
topology: tpu7x:2x2x1
jax: 0.10.0
libtpu: 0.0.40
codegen_flags: <defaults>
</compile_context>

<pallas_src>
import functools
import math

import jax
import jax.numpy as jnp
from jax.experimental import pallas as pl
from jax.experimental.pallas import tpu as pltpu

_LANES = 128
_ROW_ALIGN = 32                      # row multiple safe for f32/bf16/int8 tiling
_BLOCK_F32_BYTES = 2 * 1024 * 1024   # ~2 MiB (f32-equivalent) per input block
_MAX_NATIVE_COLS = 8192              # widest last dim for the zero-copy ragged path
_VMEM_LIMIT_BYTES = 48 * 1024 * 1024 # explicit scoped-VMEM limit (v7x-safe)


def _round_up(x, m):
    return ((x + m - 1) // m) * m


@functools.lru_cache(maxsize=1)
def _tensorcores_per_chip():
    """Best-effort TensorCore count per chip (2 on v7x, 1 on v5e/v6e)."""
    try:
        info = pltpu.get_tpu_info()
        for name in ("num_cores", "core_count", "num_tensorcores",
                     "tensorcores_per_chip", "cores_per_chip"):
            v = getattr(info, name, None)
            if isinstance(v, int) and 1 <= v <= 8:
                return v
    except Exception:
        pass
    # TODO(synk): if TpuInfo exposes an explicit TC-count field, use it so the
    # leading "parallel" axis always engages both v7x TensorCores.
    return 1


def _focal_bce_kernel(l_ref, t_ref, out_ref, *, full_rows, rem_cols, gamma,
                      steps_per_core, two_axes):
    rows, cols = l_ref.shape

    if two_axes:
        c = pl.program_id(0)               # parallel (core-split) axis
        j = pl.program_id(1)               # arbitrary (reduction) axis
        block_index = c * steps_per_core + j
    else:
        j = pl.program_id(0)
        block_index = j

    @pl.when(j == 0)
    def _init():
        out_ref[...] = jnp.zeros_like(out_ref)

    l = l_ref[...].astype(jnp.float32)
    t = t_ref[...].astype(jnp.float32)

    # sigmoid(l) via tanh: one EUP transcendental instead of exp + reciprocal.
    p = 0.5 * jnp.tanh(0.5 * l) + 0.5
    p = jnp.where(t >= 0.5, p, 1.0 - p)
    logp = -jnp.log(jnp.clip(p, 0.0001, 1.0 - 0.0001))
    one_minus_p = 1.0 - p
    if gamma == 2:
        focal = one_minus_p * one_minus_p          # plain VPU multiply
    elif isinstance(gamma, int):
        focal = one_minus_p ** gamma               # integer_pow -> VPU multiplies
    else:
        focal = one_minus_p ** jnp.float32(gamma)  # float gamma: EUP exp/log path
    loss = logp * focal

    block_row_start = block_index * rows           # row index, not element index

    def _accumulate(vals):
        # Split only the sublane-major axis; the reduce is pure per-lane VPU adds
        # into the resident (1, 8, cols) accumulator block.
        partial = vals.reshape(-1, 8, cols).sum(axis=0)
        out_ref[...] += partial[None, :, :]

    fully_valid = block_row_start + rows <= full_rows

    @pl.when(fully_valid)
    def _fast_path():
        _accumulate(loss)

    @pl.when(jnp.logical_not(fully_valid))
    def _masked_path():
        # Only blocks straddling / past the valid boundary (or clamped phantom
        # steps) pay for the iota + compare + select masking work.
        row_ids = jax.lax.broadcasted_iota(jnp.int32, (rows, cols), 0)
        g_row = block_row_start + row_ids
        mask = g_row < full_rows
        if rem_cols:
            col_ids = jax.lax.broadcasted_iota(jnp.int32, (rows, cols), 1)
            mask = jnp.logical_or(
                mask, jnp.logical_and(g_row == full_rows, col_ids < rem_cols))
        _accumulate(jnp.where(mask, loss, 0.0))


def focal_bce_with_logits_loss(logits, targets, *, num_label=1, gamma=2):
    """Scalar f32 loss matching FocalBCEWithLogitsLoss.forward."""
    n = int(math.prod(logits.shape))
    if n == 0:
        return jnp.float32(jnp.nan)        # torch.mean of an empty tensor is NaN

    t_in = targets
    if t_in.dtype == jnp.bool_:
        t_in = t_in.astype(jnp.int8)

    if n % _LANES == 0:
        # Common case: free bitcast to a lane-dense (rows, 128) view, no copies.
        cols = _LANES
        l2 = jnp.reshape(logits, (-1, _LANES))
        t2 = jnp.reshape(t_in, (-1, _LANES))
    elif logits.ndim >= 2 and _LANES <= logits.shape[-1] <= _MAX_NATIVE_COLS:
        # Ragged total but wide native last dim: stream (R, C) blocks directly
        # (full-extent C) -- zero extra HBM traffic, masking only on the row axis.
        cols = int(logits.shape[-1])
        l2 = jnp.reshape(logits, (-1, cols))
        t2 = jnp.reshape(t_in, (-1, cols))
    else:
        # Rare fallback (ragged + tiny/absent last dim): one pad copy. Since we
        # pay the copy anyway, fold the targets down-cast to an int8 0/1 mask
        # into it to cut target bandwidth 4x in the kernel.
        cols = _LANES
        lf = jnp.ravel(logits)
        tf = (jnp.ravel(t_in) >= 0.5).astype(jnp.int8)
        pad = _round_up(n, _LANES) - n
        if pad:
            lf = jnp.pad(lf, (0, pad))
            tf = jnp.pad(tf, (0, pad))
        l2 = lf.reshape(-1, _LANES)
        t2 = tf.reshape(-1, _LANES)

    num_rows = int(l2.shape[0])
    full_rows, rem_cols = divmod(n, cols)

    # ~2 MiB (f32-equivalent, padded-lane) input blocks: amortizes the
    # ~0.35us/step grid overhead while staying well inside the 48 MiB scoped
    # VMEM budget with double-buffering + f32 temporaries (v7x-safe).
    lanes_padded = _round_up(cols, _LANES)
    budget_rows = max(
        _ROW_ALIGN,
        (_BLOCK_F32_BYTES // (lanes_padded * 4)) // _ROW_ALIGN * _ROW_ALIGN)
    tile_rows = min(budget_rows, _round_up(num_rows, _ROW_ALIGN))
    num_blocks = pl.cdiv(num_rows, tile_rows)

    num_cores = _tensorcores_per_chip()
    num_splits = num_cores if (num_cores > 1 and num_blocks >= num_cores) else 1
    steps_per_core = pl.cdiv(num_blocks, num_splits)
    last_block = num_blocks - 1
    two_axes = num_splits > 1

    if two_axes:
        grid = (num_splits, steps_per_core)
        dim_sem = ("parallel", "arbitrary")

        def in_index_map(c, j):
            # Clamp phantom steps (num_splits not dividing num_blocks) onto the
            # last real block; in-kernel row masking zeroes their contribution.
            return (jnp.minimum(c * steps_per_core + j, last_block), 0)

        out_index_map = lambda c, j: (c, 0, 0)
    else:
        grid = (steps_per_core,)
        dim_sem = ("arbitrary",)
        in_index_map = lambda j: (j, 0)
        out_index_map = lambda j: (0, 0, 0)

    kernel = functools.partial(
        _focal_bce_kernel, full_rows=full_rows, rem_cols=rem_cols, gamma=gamma,
        steps_per_core=steps_per_core, two_axes=two_axes)

    bytes_in = l2.size * l2.dtype.itemsize + t2.size * t2.dtype.itemsize
    cost = pl.CostEstimate(
        flops=12 * n,
        transcendentals=2 * n,                 # tanh + log per element
        bytes_accessed=bytes_in + num_splits * 8 * cols * 4)

    partials = pl.pallas_call(
        kernel,
        out_shape=jax.ShapeDtypeStruct((num_splits, 8, cols), jnp.float32),
        grid_spec=pltpu.PrefetchScalarGridSpec(
            num_scalar_prefetch=0,
            grid=grid,
            in_specs=[
                pl.BlockSpec((tile_rows, cols), in_index_map),
                pl.BlockSpec((tile_rows, cols), in_index_map),
            ],
            out_specs=pl.BlockSpec((1, 8, cols), out_index_map),
        ),
        compiler_params=pltpu.CompilerParams(
            dimension_semantics=dim_sem,
            vmem_limit_bytes=_VMEM_LIMIT_BYTES,
        ),
        cost_estimate=cost,
    )(l2, t2)

    # Note: running f32 accumulation; for n >> 1e8 expect small drift vs a
    # pairwise/f64 reference (same order as torch's f32 mean).
    total = jnp.sum(partials)
    return jnp.float32(num_label) * (total / jnp.float32(n))


def _reference(logits, targets, *, num_label=1, gamma=2):
    l = jnp.ravel(logits).astype(jnp.float32)
    t = jnp.ravel(targets).astype(jnp.float32)
    p = jax.nn.sigmoid(l)
    p = jnp.where(t >= 0.5, p, 1.0 - p)
    logp = -jnp.log(jnp.clip(p, 0.0001, 1.0 - 0.0001))
    return num_label * jnp.mean(logp * (1.0 - p) ** gamma)


if __name__ == "__main__":
    key = jax.random.PRNGKey(0)
    k1, k2, k3, k4, k5, k6 = jax.random.split(key, 6)

    # 1) Aligned case (B=2, C=4, H=16, W=16) f32: zero-copy flat (rows,128) path.
    logits1 = jax.random.normal(k1, (2, 4, 16, 16), dtype=jnp.float32)
    targets1 = (jax.random.uniform(k2, (2, 4, 16, 16)) > 0.5).astype(jnp.float32)
    loss1 = jax.block_until_ready(
        focal_bce_with_logits_loss(logits1, targets1, num_label=1, gamma=2))
    ref1 = _reference(logits1, targets1, num_label=1, gamma=2)
    assert jnp.allclose(loss1, ref1, rtol=1e-5, atol=1e-6), (loss1, ref1)

    # 2) Ragged total (n % 128 != 0) with a wide last dim: zero-copy (R, 177)
    #    native-column path, multi-block grid, bf16 logits.
    logits2 = jax.random.normal(k3, (3, 1000, 177), dtype=jnp.float32).astype(jnp.bfloat16)
    targets2 = (jax.random.uniform(k4, (3, 1000, 177)) > 0.5).astype(jnp.float32)
    loss2 = jax.block_until_ready(
        focal_bce_with_logits_loss(logits2, targets2, num_label=3, gamma=2))
    ref2 = _reference(logits2, targets2, num_label=3, gamma=2)
    assert jnp.allclose(loss2, ref2, rtol=1e-4, atol=1e-6), (loss2, ref2)

    # 3) Ragged with a tiny last dim + bool targets: pad-fallback path with the
    #    targets int8 down-cast folded into the same copy.
    logits3 = jax.random.normal(k5, (7, 33), dtype=jnp.float32)
    targets3 = jax.random.uniform(k6, (7, 33)) > 0.5
    loss3 = jax.block_until_ready(
        focal_bce_with_logits_loss(logits3, targets3, num_label=1, gamma=2))
    ref3 = _reference(logits3, targets3, num_label=1, gamma=2)
    assert jnp.allclose(loss3, ref3, rtol=1e-5, atol=1e-6), (loss3, ref3)

    print("KERNEL_OK")
</pallas_src>

<mosaic_0001>
module attributes {stable_mosaic.version = 11 : i64} {
  func.func @_focal_bce_kernel(%arg0: i32, %arg1: memref<32x128xf32, #tpu.memory_space<vmem>>, %arg2: memref<32x128xf32, #tpu.memory_space<vmem>>, %arg3: memref<1x8x128xf32, #tpu.memory_space<vmem>>) attributes {dimension_semantics = [#tpu.dimension_semantics<arbitrary>], iteration_bounds = array<i64: 1>, scalar_prefetch = 0 : i64, scratch_operands = 0 : i64, tpu.core_type = #tpu.core_type<tc>, window_params = [{transform_indices = @transform_0, window_bounds = array<i64: 32, 128>}, {transform_indices = @transform_1, window_bounds = array<i64: 32, 128>}, {pipeline_mode = #tpu.pipeline_mode<synchronous>, transform_indices = @transform_2, window_bounds = array<i64: 1, 8, 128>}]} {
    %c0_i32 = arith.constant 0 : i32
    %0 = arith.cmpi eq, %arg0, %c0_i32 : i32
    %1 = arith.extui %0 : i1 to i32
    %c0_i32_0 = arith.constant 0 : i32
    %2 = arith.cmpi ne, %1, %c0_i32_0 : i32
    scf.if %2 {
      %cst_15 = arith.constant 0.000000e+00 : f32
      %36 = vector.broadcast %cst_15 : f32 to vector<1x8x128xf32>
      %c0_16 = arith.constant 0 : index
      %c0_17 = arith.constant 0 : index
      %c0_18 = arith.constant 0 : index
      %37 = vector.load %arg3[%c0_16, %c0_17, %c0_18] : memref<1x8x128xf32, #tpu.memory_space<vmem>>, vector<1x8x128xf32>
      tpu.vector_store %arg3[%c0_16, %c0_17, %c0_18], %36 {strides = array<i32>} : memref<1x8x128xf32, #tpu.memory_space<vmem>>, vector<1x8x128xf32>,
    } else {
    }
    %c0 = arith.constant 0 : index
    %c0_1 = arith.constant 0 : index
    %3 = vector.load %arg1[%c0, %c0_1] : memref<32x128xf32, #tpu.memory_space<vmem>>, vector<32x128xf32>
    %c0_2 = arith.constant 0 : index
    %c0_3 = arith.constant 0 : index
    %4 = vector.load %arg2[%c0_2, %c0_3] : memref<32x128xf32, #tpu.memory_space<vmem>>, vector<32x128xf32>
    %cst = arith.constant 5.000000e-01 : f32
    %5 = vector.broadcast %cst : f32 to vector<32x128xf32>
    %6 = arith.mulf %5, %3 : vector<32x128xf32>
    %7 = math.tanh %6 : vector<32x128xf32>
    %cst_4 = arith.constant 5.000000e-01 : f32
    %8 = vector.broadcast %cst_4 : f32 to vector<32x128xf32>
    %9 = arith.mulf %8, %7 : vector<32x128xf32>
    %cst_5 = arith.constant 5.000000e-01 : f32
    %10 = vector.broadcast %cst_5 : f32 to vector<32x128xf32>
    %11 = arith.addf %9, %10 : vector<32x128xf32>
    %cst_6 = arith.constant 5.000000e-01 : f32
    %12 = vector.broadcast %cst_6 : f32 to vector<32x128xf32>
    %13 = arith.cmpf oge, %4, %12 : vector<32x128xf32>
    %cst_7 = arith.constant 1.000000e+00 : f32
    %14 = vector.broadcast %cst_7 : f32 to vector<32x128xf32>
    %15 = arith.subf %14, %11 : vector<32x128xf32>
    %16 = arith.select %13, %11, %15 : vector<32x128xi1>, vector<32x128xf32>
    %cst_8 = arith.constant 9.99999974E-5 : f32
    %cst_9 = arith.constant 0.999899983 : f32
    %17 = vector.broadcast %cst_8 : f32 to vector<32x128xf32>
    %18 = arith.maximumf %17, %16 : vector<32x128xf32>
    %19 = vector.broadcast %cst_9 : f32 to vector<32x128xf32>
    %20 = arith.minimumf %19, %18 : vector<32x128xf32>
    %21 = math.log %20 : vector<32x128xf32>
    %cst_10 = arith.constant 0.000000e+00 : f32
    %22 = vector.broadcast %cst_10 : f32 to vector<32x128xf32>
    %23 = arith.subf %22, %21 : vector<32x128xf32>
    %cst_11 = arith.constant 1.000000e+00 : f32
    %24 = vector.broadcast %cst_11 : f32 to vector<32x128xf32>
    %25 = arith.subf %24, %16 : vector<32x128xf32>
    %26 = arith.mulf %25, %25 : vector<32x128xf32>
    %27 = arith.mulf %23, %26 : vector<32x128xf32>
    %c32_i32 = arith.constant 32 : i32
    %28 = arith.muli %arg0, %c32_i32 : i32
    %c32_i32_12 = arith.constant 32 : i32
    %29 = arith.addi %28, %c32_i32_12 : i32
    %c16_i32 = arith.constant 16 : i32
    %30 = arith.cmpi sle, %29, %c16_i32 : i32
    %31 = arith.extui %30 : i1 to i32
    %c0_i32_13 = arith.constant 0 : i32
    %32 = arith.cmpi ne, %31, %c0_i32_13 : i32
    scf.if %32 {
      %36 = vector.shape_cast %27 : vector<32x128xf32> to vector<4x8x128xf32>
      %cst_15 = arith.constant dense<0.000000e+00> : vector<8x128xf32>
      %37 = vector.multi_reduction <add>, %36, %cst_15 [0] : vector<4x8x128xf32> to vector<8x128xf32>
      %c0_16 = arith.constant 0 : index
      %c0_17 = arith.constant 0 : index
      %c0_18 = arith.constant 0 : index
      %38 = vector.load %arg3[%c0_16, %c0_17, %c0_18] : memref<1x8x128xf32, #tpu.memory_space<vmem>>, vector<1x8x128xf32>
      %39 = vector.shape_cast %37 : vector<8x128xf32> to vector<1x8x128xf32>
      %40 = arith.addf %38, %39 : vector<1x8x128xf32>
      %c0_19 = arith.constant 0 : index
      %c0_20 = arith.constant 0 : index
      %c0_21 = arith.constant 0 : index
      %41 = vector.load %arg3[%c0_19, %c0_20, %c0_21] : memref<1x8x128xf32, #tpu.memory_space<vmem>>, vector<1x8x128xf32>
      tpu.vector_store %arg3[%c0_19, %c0_20, %c0_21], %40 {strides = array<i32>} : memref<1x8x128xf32, #tpu.memory_space<vmem>>, vector<1x8x128xf32>,
    } else {
    }
    %true = arith.constant true
    %33 = arith.xori %30, %true : i1
    %34 = arith.extui %33 : i1 to i32
    %c0_i32_14 = arith.constant 0 : i32
    %35 = arith.cmpi ne, %34, %c0_i32_14 : i32
    scf.if %35 {
      %36 = tpu.iota {dimensions = array<i32: 0>} : vector<32x128xi32>
      %37 = vector.broadcast %28 : i32 to vector<32x128xi32>
      %38 = arith.addi %37, %36 : vector<32x128xi32>
      %c16_i32_15 = arith.constant 16 : i32
      %39 = vector.broadcast %c16_i32_15 : i32 to vector<32x128xi32>
      %40 = arith.cmpi slt, %38, %39 : vector<32x128xi32>
      %cst_16 = arith.constant 0.000000e+00 : f32
      %41 = vector.broadcast %cst_16 : f32 to vector<32x128xf32>
      %42 = arith.select %40, %27, %41 : vector<32x128xi1>, vector<32x128xf32>
      %43 = vector.shape_cast %42 : vector<32x128xf32> to vector<4x8x128xf32>
      %cst_17 = arith.constant dense<0.000000e+00> : vector<8x128xf32>
      %44 = vector.multi_reduction <add>, %43, %cst_17 [0] : vector<4x8x128xf32> to vector<8x128xf32>
      %c0_18 = arith.constant 0 : index
      %c0_19 = arith.constant 0 : index
      %c0_20 = arith.constant 0 : index
      %45 = vector.load %arg3[%c0_18, %c0_19, %c0_20] : memref<1x8x128xf32, #tpu.memory_space<vmem>>, vector<1x8x128xf32>
      %46 = vector.shape_cast %44 : vector<8x128xf32> to vector<1x8x128xf32>
      %47 = arith.addf %45, %46 : vector<1x8x128xf32>
      %c0_21 = arith.constant 0 : index
      %c0_22 = arith.constant 0 : index
      %c0_23 = arith.constant 0 : index
      %48 = vector.load %arg3[%c0_21, %c0_22, %c0_23] : memref<1x8x128xf32, #tpu.memory_space<vmem>>, vector<1x8x128xf32>
      tpu.vector_store %arg3[%c0_21, %c0_22, %c0_23], %47 {strides = array<i32>} : memref<1x8x128xf32, #tpu.memory_space<vmem>>, vector<1x8x128xf32>,
    } else {
    }
    return
  }
  func.func @transform_0(%arg0: i32) -> (i32, i32) {
    %c0_i32 = arith.constant 0 : i32
    %c0_i32_0 = arith.constant 0 : i32
    return %arg0, %c0_i32 : i32, i32
  }
  func.func @transform_1(%arg0: i32) -> (i32, i32) {
    %c0_i32 = arith.constant 0 : i32
    %c0_i32_0 = arith.constant 0 : i32
    return %arg0, %c0_i32 : i32, i32
  }
  func.func @transform_2(%arg0: i32) -> (i32, i32, i32) {
    %c0_i32 = arith.constant 0 : i32
    %c0_i32_0 = arith.constant 0 : i32
    %c0_i32_1 = arith.constant 0 : i32
    %c0_i32_2 = arith.constant 0 : i32
    return %c0_i32, %c0_i32_0, %c0_i32_1 : i32, i32, i32
  }
}

</mosaic_0001>

<llo_original>
// kernel: tpu_custom_call.1
$region0: #{tpu_custom_call.1}
  #allocation0 [shape = 'u32[]', space=smem, size = 0x4, offset = 0x4, fixed_abs, tag = 'smem constant byte address 0x4 - core index']
  #allocation1 [shape = 'u32[144,128]{1,0:T(1,128)}', space=vmem, size = 0x12000, scoped, tag = 'internal scratch']
  %s0 = inlined_call_operand.hbm [shape: f32[16,128], index: 0, kind: input, shape index: {}]
  %s1 = inlined_call_operand.hbm [shape: f32[16,128], index: 1, kind: input, shape index: {}]
  %s2 = inlined_call_operand.hbm [shape: f32[1,8,128], index: 2, kind: output, shape index: {}]
  %s3 = sld [smem:[#allocation0]]
  $region38: #{tpu_custom_call.1} parent=0
    _
  %s5 = ssub.s32 1, %s3
  %s6 = scalar_select 0, %s5, %s3
  $region1: #{tpu_custom_call.1} parent=0
    #allocation2 [shape = 'u8[16384]{0}', space=vmem, size = 0x4000, scoped, tag = 'input window, operand 0, single buffered']
    #allocation3 [shape = 's32[1]{0}', space=sflag, size = 0x4, scoped, tag = 'scoped memory for tpu_custom_call.1']
    #allocation4 [shape = 's32[1]{0}', space=sflag, size = 0x4, scoped, tag = 'scoped memory for tpu_custom_call.1']
    #allocation5 [shape = 'u8[16384]{0}', space=vmem, size = 0x4000, scoped, tag = 'input window, operand 1, single buffered']
    #allocation6 [shape = 's32[1]{0}', space=sflag, size = 0x4, scoped, tag = 'scoped memory for tpu_custom_call.1']
    #allocation7 [shape = 'u8[4096]{0}', space=vmem, size = 0x1000, scoped, tag = 'output window, operand 0, single buffered']
    %7 = vsyncpa [#allocation3], 0
    %8 = vsyncpa [#allocation6], 0
    %9 = vsyncpa [#allocation4], 0
    // Predicated region
    $region2: #{tpu_custom_call.1} parent=1 // pred_check
      _
    $region3: #{tpu_custom_call.1} parent=1 // pred_check_branch
      %11 = sbr.rel (0) target = $region5
    $region4: #{tpu_custom_call.1} parent=1 // pred_region
      %s13 = ssub.s32 512, 256
      %14 = vsyncadd [#allocation3], %s13
      %s15 = sshll.u32 [#allocation2], 4
      %s16 = int_to_ptr.vmem [resolvable:$true] %s15
      %21 = dma.hbm_to_vmem [thread:$0]  %s0, 256, %s16, [#allocation3], 128, 128, 8
    $region5: #{tpu_custom_call.1} parent=1 // pred_fallthru
      _
    // Predicated region
    $region6: #{tpu_custom_call.1} parent=1 // pred_check
      _
    $region7: #{tpu_custom_call.1} parent=1 // pred_check_branch
      %23 = sbr.rel (0) target = $region9
    $region8: #{tpu_custom_call.1} parent=1 // pred_region
      %s25 = ssub.s32 512, 256
      %26 = vsyncadd [#allocation6], %s25
      %s27 = sshll.u32 [#allocation5], 4
      %s28 = int_to_ptr.vmem [resolvable:$true] %s27
      %33 = dma.hbm_to_vmem [thread:$0]  %s1, 256, %s28, [#allocation6], 128, 128, 8
    $region9: #{tpu_custom_call.1} parent=1 // pred_fallthru
      _
    // Predicated region
    $region10: #{tpu_custom_call.1} parent=1 // pred_check
      _
    $region11: #{tpu_custom_call.1} parent=1 // pred_check_branch
      %35 = sbr.rel (0) target = $region13
    $region12: #{tpu_custom_call.1} parent=1 // pred_region
      %36 = dma.done [#allocation3], 512
    $region13: #{tpu_custom_call.1} parent=1 // pred_fallthru
      _
    // Predicated region
    $region14: #{tpu_custom_call.1} parent=1 // pred_check
      _
    $region15: #{tpu_custom_call.1} parent=1 // pred_check_branch
      %38 = sbr.rel (0) target = $region17
    $region16: #{tpu_custom_call.1} parent=1 // pred_region
      %39 = dma.done [#allocation6], 512
    $region17: #{tpu_custom_call.1} parent=1 // pred_fallthru
      _
    %p40 = scmp.eq.s32.totalorder 0, 0
    // Predicated region
    $region18: #{tpu_custom_call.1} parent=1 // pred_check
      %p41 = pneg %p40
    $region19: #{tpu_custom_call.1} parent=1 // pred_check_branch
      %43 = sbr.rel (%p41) target = $region21
    $region20: #{tpu_custom_call.1} parent=1 // pred_region
      %44 = vst [vmem:[#allocation7] sm:$0xff] 0.0
    $region21: #{tpu_custom_call.1} parent=1 // pred_fallthru
      _
    %v45 = vld [vmem:[#allocation2] sm:$0xff]
    %v46 = vld [vmem:[#allocation2 + $0x8] sm:$0xff]
    %v47 = vld [vmem:[#allocation2 + $0x10] sm:$0xff]
    %v48 = vld [vmem:[#allocation2 + $0x18] sm:$0xff]
    %v49 = vld [vmem:[#allocation5] sm:$0xff]
    %v50 = vld [vmem:[#allocation5 + $0x8] sm:$0xff]
    %v51 = vld [vmem:[#allocation5 + $0x10] sm:$0xff]
    %v52 = vld [vmem:[#allocation5 + $0x18] sm:$0xff]
    %v53 = vmul.f32 %v45, 0.5
    %v54 = vmul.f32 %v46, 0.5
    %v55 = vmul.f32 %v47, 0.5
    %v56 = vmul.f32 %v48, 0.5
    %v57 = vtanh.pop %v53
    %v58 = vtanh.pop %v54
    %v59 = vtanh.pop %v55
    %v60 = vtanh.pop %v56
    %v61 = vmul.f32 %v57, 0.5
    %v62 = vmul.f32 %v58, 0.5
    %v63 = vmul.f32 %v59, 0.5
    %v64 = vmul.f32 %v60, 0.5
    %v65 = vadd.f32 %v61, 0.5
    %v66 = vadd.f32 %v62, 0.5
    %v67 = vadd.f32 %v63, 0.5
    %v68 = vadd.f32 %v64, 0.5
    %vm69 = vcmp.ge.f32.partialorder %v49, 0.5
    %vm70 = vcmp.ge.f32.partialorder %v50, 0.5
    %vm71 = vcmp.ge.f32.partialorder %v51, 0.5
    %vm72 = vcmp.ge.f32.partialorder %v52, 0.5
    %v73 = vsub.f32 1.0, %v65
    %v74 = vsub.f32 1.0, %v66
    %v75 = vsub.f32 1.0, %v67
    %v76 = vsub.f32 1.0, %v68
    %v77 = vsel %vm69, %v65, %v73
    %v78 = vsel %vm70, %v66, %v74
    %v79 = vsel %vm71, %v67, %v75
    %v80 = vsel %vm72, %v68, %v76
    %v81 = vmax.f32 %v77, 0.0001
    %v82 = vmax.f32 %v78, 0.0001
    %v83 = vmax.f32 %v79, 0.0001
    %v84 = vmax.f32 %v80, 0.0001
    %v85 = vmin.f32 %v81, 0.9999
    %v86 = vmin.f32 %v82, 0.9999
    %v87 = vmin.f32 %v83, 0.9999
    %v88 = vmin.f32 %v84, 0.9999
    %v89 = vlog2.pop %v85
    %v90 = vmul.f32 %v89, 0.6931472
    %v91 = vlog2.pop %v86
    %v92 = vmul.f32 %v91, 0.6931472
    %v93 = vlog2.pop %v87
    %v94 = vmul.f32 %v93, 0.6931472
    %v95 = vlog2.pop %v88
    %v96 = vmul.f32 %v95, 0.6931472
    %v97 = vsub.f32 0.0, %v90
    %v98 = vsub.f32 0.0, %v92
    %v99 = vsub.f32 0.0, %v94
    %v100 = vsub.f32 0.0, %v96
    %v101 = vsub.f32 1.0, %v77
    %v102 = vsub.f32 1.0, %v78
    %v103 = vsub.f32 1.0, %v79
    %v104 = vsub.f32 1.0, %v80
    %v105 = vmul.f32 %v101, %v101
    %v106 = vmul.f32 %v102, %v102
    %v107 = vmul.f32 %v103, %v103
    %v108 = vmul.f32 %v104, %v104
    %v109 = vmul.f32 %v97, %v105
    %v110 = vmul.f32 %v98, %v106
    %v111 = vmul.f32 %v99, %v107
    %v112 = vmul.f32 %v100, %v108
    %s113 = smul.u32 0, 32
    %s114 = sadd.s32 %s113, 32
    %p115 = scmp.le.s32.totalorder %s114, 16
    // Predicated region
    $region22: #{tpu_custom_call.1} parent=1 // pred_check
      %p116 = pneg %p115
    $region23: #{tpu_custom_call.1} parent=1 // pred_check_branch
      %118 = sbr.rel (%p116) target = $region25
    $region24: #{tpu_custom_call.1} parent=1 // pred_region
      %v119 = vadd.f32 %v109, %v110
      %v120 = vadd.f32 %v119, %v111
      %v121 = vadd.f32 %v120, %v112
      %v122 = vld [vmem:[#allocation7] sm:$0xff]
      %v123 = vadd.f32 %v122, %v121
      %124 = vst [vmem:[#allocation7] sm:$0xff] %v123
    $region25: #{tpu_custom_call.1} parent=1 // pred_fallthru
      _
    %p125 = scmp.gt.s32.totalorder %s114, 16
    // Predicated region
    $region26: #{tpu_custom_call.1} parent=1 // pred_check
      %p126 = pneg %p125
    $region27: #{tpu_custom_call.1} parent=1 // pred_check_branch
      %128 = sbr.rel (%p126) target = $region29
    $region28: #{tpu_custom_call.1} parent=1 // pred_region
      %v129 = vlaneseq
      %v130 = vshrl.u32 %v129, 7
      %v131 = vadd.s32 %v130, 8
      %v132 = vadd.s32 %v130, 16
      %v133 = vadd.s32 %v130, 24
      %v134 = vstv %s113
      %v135 = vadd.s32 %v134, %v130
      %v136 = vadd.s32 %v134, %v131
      %v137 = vadd.s32 %v134, %v132
      %v138 = vadd.s32 %v134, %v133
      %vm139 = vcmp.lt.s32.totalorder %v135, 16
      %vm140 = vcmp.lt.s32.totalorder %v136, 16
      %vm141 = vcmp.lt.s32.totalorder %v137, 16
      %vm142 = vcmp.lt.s32.totalorder %v138, 16
      %v143 = vsel %vm139, %v109, 0.0
      %v144 = vsel %vm140, %v110, 0.0
      %v145 = vsel %vm141, %v111, 0.0
      %v146 = vsel %vm142, %v112, 0.0
      %v147 = vadd.f32 %v143, %v144
      %v148 = vadd.f32 %v147, %v145
      %v149 = vadd.f32 %v148, %v146
      %v150 = vld [vmem:[#allocation7] sm:$0xff]
      %v151 = vadd.f32 %v150, %v149
      %152 = vst [vmem:[#allocation7] sm:$0xff] %v151
    $region29: #{tpu_custom_call.1} parent=1 // pred_fallthru
      _
    // Predicated region
    $region30: #{tpu_custom_call.1} parent=1 // pred_check
      _
    $region31: #{tpu_custom_call.1} parent=1 // pred_check_branch
      %154 = sbr.rel (0) target = $region33
    $region32: #{tpu_custom_call.1} parent=1 // pred_region
      %s156 = ssub.s32 128, 128
      %157 = vsyncadd [#allocation4], %s156
      %s159 = sshll.u32 [#allocation7], 4
      %s160 = int_to_ptr.vmem [resolvable:$true] %s159
      %162 = dma.vmem_to_hbm [thread:$0]  %s160, 128, %s2, [#allocation4]
    $region33: #{tpu_custom_call.1} parent=1 // pred_fallthru
      _
    // Predicated region
    $region34: #{tpu_custom_call.1} parent=1 // pred_check
      _
    $region35: #{tpu_custom_call.1} parent=1 // pred_check_branch
      %164 = sbr.rel (0) target = $region37
    $region36: #{tpu_custom_call.1} parent=1 // pred_region
      %165 = dma.done [#allocation4], 128
    $region37: #{tpu_custom_call.1} parent=1 // pred_fallthru
      _
    %166 = vsyncpa [#allocation3], 1
    %167 = vsyncpa [#allocation6], 1
    %168 = vsyncpa [#allocation4], 1

</llo_original>
